<compile_context>
chip_gen: v7x
topology: tpu7x:2x2x1
jax: 0.10.0
libtpu: 0.0.40
codegen_flags: <defaults>
</compile_context>

<pallas_src>
import jax
import jax.numpy as jnp
from jax.experimental import pallas as pl
from jax.experimental.pallas import tpu as pltpu


def _anticipation_kernel(x_ref, o_ref):
    # x_ref: (TN, C, TL) block in VMEM; o_ref: (TN, TL) block in VMEM.
    # Single sublane reduce over the mode/channel axis (maps to the XLU slot,
    # leaving VALU/vld-vst free), accumulating in f32.
    o_ref[...] = jnp.sum(x_ref[...].astype(jnp.float32), axis=1).astype(o_ref.dtype)


def _tpu_tuning():
    """Per-generation per-step byte budget, min total grid steps, VMEM cap."""
    try:
        info = pltpu.get_tpu_info()
        vmem = int(getattr(info, "vmem_capacity_bytes"))
    except Exception:
        # Unknown chip / interpret mode: conservative defaults safe on v7x.
        return (8 << 20), 2, (48 << 20)
    if vmem <= (64 << 20):
        # v7x: 64 MiB VMEM/TC, ~3.2 TB/s HBM, 2 TensorCores -> big blocks to
        # amortize step overhead, >= 2 steps per core, cap below physical VMEM.
        return (16 << 20), 4, max(32 << 20, vmem - (8 << 20))
    # v5e / v6e: 128 MiB VMEM, single TensorCore.
    return (8 << 20), 2, max(32 << 20, vmem - (16 << 20))


def _choose_tiles(N, C, L, itemsize, target_bytes, min_grid_steps):
    """Pick (TN, TL): ~target_bytes input blocks, lane/sublane aligned,
    full-L contiguous slabs when they fit, and >= min_grid_steps grid steps."""
    sub = min(8, N)  # smallest useful sublane granule along N
    # ---- lane (L) tile: prefer the whole L (one contiguous DMA per sample).
    if L <= 128 or sub * C * L * itemsize <= target_bytes:
        TL = L
    else:
        TL = (target_bytes // (sub * C * itemsize)) // 128 * 128
        TL = int(max(128, min((L // 128) * 128, TL)))
    l_blocks = -(-L // TL)

    # ---- sample (N) tile: fill the remaining per-step budget, but keep at
    # least `min_grid_steps` total steps (pipeline overlap / 2 TCs on v7x).
    rows = max(sub, target_bytes // (C * TL * itemsize))
    n_blocks_wanted = -(-min_grid_steps // l_blocks)
    if n_blocks_wanted > 1:
        rows = min(rows, max(sub, -(-N // n_blocks_wanted)))
    if rows >= N or N <= 8:
        TN = N
    else:
        TN = max(8, (rows // 8) * 8)
    return int(TN), int(TL)


_PALLAS_MIN_BYTES = 256 << 10  # below this, XLA's fused reduction wins


def anticipation_module(predicted_modes: jax.Array, *, tn=None, tl=None) -> jax.Array:
    """Sum over axis=1 (modes/channels) with keepdims, via a Pallas TPU kernel.

    predicted_modes: (N, C, L) -> (N, 1, L)   |   (N, C) -> (N, 1)
    """
    squeeze_back = predicted_modes.ndim == 2
    if squeeze_back:
        predicted_modes = predicted_modes[:, :, None]
    N, C, L = predicted_modes.shape
    itemsize = jnp.dtype(predicted_modes.dtype).itemsize

    forced = (tn is not None) or (tl is not None)
    if not forced and N * C * L * itemsize < _PALLAS_MIN_BYTES:
        # Tiny input (nominal N=2,C=8,L=16 / 2-D docstring case): a (1,1) grid
        # has no DMA/compute overlap and lane-sparse stores; skip Pallas.
        out = jnp.sum(predicted_modes, axis=1, keepdims=True)
        return out[:, :, 0] if squeeze_back else out

    target_bytes, min_grid_steps, vmem_cap = _tpu_tuning()
    TN, TL = _choose_tiles(N, C, L, itemsize, target_bytes, min_grid_steps)
    if tn is not None:
        TN = int(tn)
    if tl is not None:
        TL = int(tl)
    # (8, 128) constraint on the output block's last two dims (TN, TL).
    if TL != L and TL % 128 != 0:
        raise ValueError(f"tl={TL} must be a multiple of 128 or equal to L={L}")
    if TN != N and TN % 8 != 0:
        raise ValueError(f"tn={TN} must be a multiple of 8 or equal to N={N}")

    grid = (pl.cdiv(N, TN), pl.cdiv(L, TL))

    # Double-buffered input + output blocks + headroom, capped below the
    # chip's physical VMEM (a 96 MiB request would not fit v7x's 64 MiB).
    block_bytes = TN * TL * itemsize * (C + 1)
    vmem_limit = int(min(vmem_cap, max(32 << 20, 2 * block_bytes + (4 << 20))))

    out = pl.pallas_call(
        _anticipation_kernel,
        out_shape=jax.ShapeDtypeStruct((N, L), predicted_modes.dtype),
        grid=grid,
        in_specs=[
            pl.BlockSpec((TN, C, TL), lambda n, l: (n, 0, l)),
        ],
        out_specs=pl.BlockSpec((TN, TL), lambda n, l: (n, l)),
        compiler_params=pltpu.CompilerParams(
            dimension_semantics=("parallel", "parallel"),
            vmem_limit_bytes=vmem_limit,
        ),
    )(predicted_modes)

    # keepdims: restore the size-1 channel axis with a free wrapper reshape.
    out = out[:, None, :]
    if squeeze_back:
        out = out[:, :, 0]
    return out


if __name__ == "__main__":
    # Module has no parameters (__init__ is empty) — nothing to initialize.
    key = jax.random.PRNGKey(0)
    k1, k2, k3, k4 = jax.random.split(key, 4)

    # Case 1: nominal module shape — 8 input channels -> 1 output channel
    # (tiny, exercises the wrapper fallback path).
    N, C, L = 2, 8, 16
    x = jax.random.normal(k1, (N, C, L), dtype=jnp.float32)
    y = jax.block_until_ready(anticipation_module(x))
    ref = jnp.sum(x, axis=1, keepdims=True)
    assert y.shape == (N, 1, L), y.shape
    assert jnp.allclose(y, ref, atol=1e-5), "mismatch vs reference (case 1)"

    # Case 2: Pallas path with forced tiles — tiled grid + ragged boundary blocks.
    N2, C2, L2 = 10, 8, 200
    x2 = jax.random.normal(k2, (N2, C2, L2), dtype=jnp.float32)
    y2 = jax.block_until_ready(anticipation_module(x2, tn=8, tl=128))
    ref2 = jnp.sum(x2, axis=1, keepdims=True)
    assert y2.shape == (N2, 1, L2), y2.shape
    assert jnp.allclose(y2, ref2, atol=1e-5), "mismatch vs reference (case 2)"

    # Case 3: 2-D input -> (N, 1) output (docstring case, fallback path).
    x3 = jax.random.normal(k3, (4, 8), dtype=jnp.float32)
    y3 = jax.block_until_ready(anticipation_module(x3))
    ref3 = jnp.sum(x3, axis=1, keepdims=True)
    assert y3.shape == (4, 1), y3.shape
    assert jnp.allclose(y3, ref3, atol=1e-5), "mismatch vs reference (case 3)"

    # Case 4: Pallas path with auto-chosen tiles — full-L contiguous blocks,
    # N split so the grid has >= min_grid_steps steps.
    N4, C4, L4 = 64, 8, 384
    x4 = jax.random.normal(k4, (N4, C4, L4), dtype=jnp.float32)
    y4 = jax.block_until_ready(anticipation_module(x4))
    ref4 = jnp.sum(x4, axis=1, keepdims=True)
    assert y4.shape == (N4, 1, L4), y4.shape
    assert jnp.allclose(y4, ref4, atol=1e-5), "mismatch vs reference (case 4)"

    print("KERNEL_OK")
</pallas_src>

<mosaic_0001>
module attributes {stable_mosaic.version = 11 : i64} {
  func.func @_anticipation_kernel(%arg0: i32, %arg1: i32, %arg2: memref<8x8x128xf32, #tpu.memory_space<vmem>>, %arg3: memref<8x128xf32, #tpu.memory_space<vmem>>) attributes {dimension_semantics = [#tpu.dimension_semantics<parallel>, #tpu.dimension_semantics<parallel>], iteration_bounds = array<i64: 2, 2>, scalar_prefetch = 0 : i64, scratch_operands = 0 : i64, tpu.core_type = #tpu.core_type<tc>, window_params = [{transform_indices = @transform_0, window_bounds = array<i64: 8, 8, 128>}, {transform_indices = @transform_1, window_bounds = array<i64: 8, 128>}]} {
    %c0 = arith.constant 0 : index
    %c0_0 = arith.constant 0 : index
    %c0_1 = arith.constant 0 : index
    %0 = vector.load %arg2[%c0, %c0_0, %c0_1] : memref<8x8x128xf32, #tpu.memory_space<vmem>>, vector<8x8x128xf32>
    %cst = arith.constant dense<0.000000e+00> : vector<8x128xf32>
    %1 = vector.multi_reduction <add>, %0, %cst [1] : vector<8x8x128xf32> to vector<8x128xf32>
    %c0_2 = arith.constant 0 : index
    %c0_3 = arith.constant 0 : index
    %2 = vector.load %arg3[%c0_2, %c0_3] : memref<8x128xf32, #tpu.memory_space<vmem>>, vector<8x128xf32>
    tpu.vector_store %arg3[%c0_2, %c0_3], %1 {strides = array<i32>} : memref<8x128xf32, #tpu.memory_space<vmem>>, vector<8x128xf32>,
    return
  }
  func.func @transform_0(%arg0: i32, %arg1: i32) -> (i32, i32, i32) {
    %c0_i32 = arith.constant 0 : i32
    %c0_i32_0 = arith.constant 0 : i32
    return %arg0, %c0_i32, %arg1 : i32, i32, i32
  }
  func.func @transform_1(%arg0: i32, %arg1: i32) -> (i32, i32) {
    %c0_i32 = arith.constant 0 : i32
    return %arg0, %arg1 : i32, i32
  }
}

</mosaic_0001>

<llo_original>
// kernel: tpu_custom_call.1
$region0: #{tpu_custom_call.1}
  #allocation0 [shape = 'u32[]', space=smem, size = 0x4, offset = 0x4, fixed_abs, tag = 'smem constant byte address 0x4 - core index']
  #allocation1 [shape = 'u32[144,128]{1,0:T(1,128)}', space=vmem, size = 0x12000, scoped, tag = 'internal scratch']
  %s0 = inlined_call_operand.hbm [shape: f32[10,8,200], index: 0, kind: input, shape index: {}]
  %s1 = inlined_call_operand.hbm [shape: f32[10,200], index: 1, kind: output, shape index: {}]
  %s2 = sld [smem:[#allocation0]]
  $region41: #{tpu_custom_call.1} parent=0
    _
  %s4 = ssub.s32 1, %s2
  %s5 = scalar_select 0, %s4, %s2
  $region1: #{tpu_custom_call.1} parent=0
    #allocation2 [shape = 'u8[65536]{0}', space=vmem, size = 0x10000, scoped, tag = 'input window, operand 0']
    #allocation3 [shape = 's32[2]{0}', space=sflag, size = 0x8, scoped, tag = 'scoped memory for tpu_custom_call.1']
    #allocation4 [shape = 's32[2]{0}', space=sflag, size = 0x8, scoped, tag = 'scoped memory for tpu_custom_call.1']
    #allocation5 [shape = 'u8[8192]{0}', space=vmem, size = 0x2000, scoped, tag = 'output window, operand 0']
    %6 = vsyncpa [#allocation3], 0
    %s7 = scalar_lea.sflag [#allocation3], 1
    %8 = vsyncpa %s7, 0
    %9 = vsyncpa [#allocation4], 0
    %s10 = scalar_lea.sflag [#allocation4], 1
    %11 = vsyncpa %s10, 0
    loop: start=0, step=1, limit=6
    $region2: #{tpu_custom_call.1} parent=1 // loop_pre_header
      _
    $region3: #{tpu_custom_call.1} parent=1 // loop_header
      %s13 = sphi 0, %s17
      %p14 = scmp.ge.s32.totalorder %s13, 6
      %s20 = sphi 0, %s32
      %s21 = sphi 0, %s28
      %s22 = sphi 0, %s20
      %s23 = sphi 0, %s21
      %s24 = sphi 0, %s22
      %s25 = sphi 0, %s23
      %s37 = sphi 0, %s39
      %s40 = sphi 0, %s37
      %s41 = sphi 0, %s40
      %s57 = sphi 0, %s41
      %s65 = sphi 0, %s67
      %s68 = sphi 0, %s65
      %s69 = sphi 0, %s68
      %s85 = sphi 0, %s69
    $region4: #{tpu_custom_call.1} parent=1 // loop_header_branch
      %16 = sbr.rel (%p14) target = $region8
    $region5: #{tpu_custom_call.1} parent=1 // loop_body
      %s18 = ssub.s32 %s13, 1
      %s19 = ssub.s32 %s13, 2
      %s26 = sadd.s32 1, %s21
      %p27 = scmp.ge.s32.totalorder %s26, 2
      %s28 = scalar_select %p27, 0, %s26
      %s29 = sadd.s32 1, %s20
      %s30 = scalar_select %p27, %s29, %s20
      %p31 = scmp.ge.s32.totalorder %s30, 2
      %s32 = scalar_select %p31, 0, %s30
      %s33 = ssub.s32 %s20, %s32
      %s34 = ssub.s32 %s21, %s28
      %s35 = sor.u32 %s33, %s34
      %p36 = scmp.eq.s32.totalorder %s35, 0
      %s38 = sadd.s32 %s37, 1
      %s39 = scalar_select %p36, %s37, %s38
      %p42 = pneg %p36
      %p43 = scmp.eq.s32.totalorder %s13, 3
      %p44 = por %p42, %p43
      %p45 = scmp.ne.s32.totalorder %s37, %s40
      %p46 = scmp.eq.s32.totalorder %s13, 0
      %p47 = por %p45, %p46
      %p48 = scmp.ne.s32.totalorder %s37, %s40
      %p49 = scmp.eq.s32.totalorder %s18, 3
      %p50 = por %p48, %p49
      %p51 = scmp.ne.s32.totalorder %s40, %s41
      %p52 = scmp.eq.s32.totalorder %s18, 0
      %p53 = por %p51, %p52
      %p54 = scmp.ne.s32.totalorder %s40, %s41
      %p55 = scmp.eq.s32.totalorder %s19, 3
      %p56 = por %p54, %p55
      %p58 = scmp.ne.s32.totalorder %s41, %s57
      %p59 = scmp.eq.s32.totalorder %s19, 0
      %p60 = por %p58, %p59
      %s61 = ssub.s32 %s20, %s32
      %s62 = ssub.s32 %s21, %s28
      %s63 = sor.u32 %s61, %s62
      %p64 = scmp.eq.s32.totalorder %s63, 0
      %s66 = sadd.s32 %s65, 1
      %s67 = scalar_select %p64, %s65, %s66
      %p70 = pneg %p64
      %p71 = scmp.eq.s32.totalorder %s13, 3
      %p72 = por %p70, %p71
      %p73 = scmp.ne.s32.totalorder %s65, %s68
      %p74 = scmp.eq.s32.totalorder %s13, 0
      %p75 = por %p73, %p74
      %p76 = scmp.ne.s32.totalorder %s65, %s68
      %p77 = scmp.eq.s32.totalorder %s18, 3
      %p78 = por %p76, %p77
      %p79 = scmp.ne.s32.totalorder %s68, %s69
      %p80 = scmp.eq.s32.totalorder %s18, 0
      %p81 = por %p79, %p80
      %p82 = scmp.ne.s32.totalorder %s68, %s69
      %p83 = scmp.eq.s32.totalorder %s19, 3
      %p84 = por %p82, %p83
      %p86 = scmp.ne.s32.totalorder %s69, %s85
      %p87 = scmp.eq.s32.totalorder %s19, 0
      %p88 = por %p86, %p87
      %p89 = scmp.le.s32.totalorder 1, %s13
      %p90 = scmp.lt.s32.totalorder %s13, 5
      %p91 = pnand %p89, %p90
      %p92 = pneg %p91
      // Predicated region
      $region9: #{tpu_custom_call.1} parent=5 // pred_check
        _
      $region10: #{tpu_custom_call.1} parent=5 // pred_check_branch
        %94 = sbr.rel (%p91) target = $region12
      $region11: #{tpu_custom_call.1} parent=5 // pred_region
        %s95 = ssub.s32 %s13, 1
      $region12: #{tpu_custom_call.1} parent=5 // pred_fallthru
        _
      %p96 = scmp.lt.s32.totalorder %s13, 4
      // Predicated region
      $region13: #{tpu_custom_call.1} parent=5 // pred_check
        %p97 = pneg %p96
      $region14: #{tpu_custom_call.1} parent=5 // pred_check_branch
        %99 = sbr.rel (%p97) target = $region16
      $region15: #{tpu_custom_call.1} parent=5 // pred_region
        // Predicated region
        $region17: #{tpu_custom_call.1} parent=15 // pred_check
          %p100 = pneg %p47
        $region18: #{tpu_custom_call.1} parent=15 // pred_check_branch
          %102 = sbr.rel (%p100) target = $region20
        $region19: #{tpu_custom_call.1} parent=15 // pred_region
          %s103 = sand.u32 %s37, 1
          %s104 = scalar_lea.sflag [#allocation3], %s103
          %s105 = sand.u32 %s37, 1
          %s106 = smul.addr %s105, 64
          %s107 = scalar_lea.vmem [#allocation2], %s106
          %s108 = smul.u32 8, %s20
          %s109 = ssub.s32 10, %s108
          %p110 = scmp.lt.s32.totalorder %s109, 8
          %s111 = scalar_select %p110, %s109, 8
          %s112 = smul.u32 128, %s111
          %s114 = ssub.s32 1024, %s112
          %115 = vsyncadd %s104, %s114
          %p116 = scmp.ne.s32.totalorder 0, %s112
          %s117 = smul.addr %s108, 2
          %s118 = sadd.s32 %s21, %s117
          %s119 = smul.addr %s118, 128
          %s120 = scalar_lea.hbm %s0, %s119
          %s121 = smul.u32 8, %s111
          %s122 = sshll.u32 %s107, 4
          %s123 = int_to_ptr.vmem [resolvable:$true] %s122
          %s124 = sshll.u32 %s121, 4
          %128 = dma.hbm_to_vmem [thread:$0]  (%p116), %s120, %s124, %s123, %s104, 256, 128, 8
        $region20: #{tpu_custom_call.1} parent=15 // pred_fallthru
          _
      $region16: #{tpu_custom_call.1} parent=5 // pred_fallthru
        _
      %p129 = scmp.le.s32.totalorder 1, %s13
      %p130 = scmp.lt.s32.totalorder %s13, 5
      %p131 = pnand %p129, %p130
      %p132 = pneg %p131
      // Predicated region
      $region21: #{tpu_custom_call.1} parent=5 // pred_check
        _
      $region22: #{tpu_custom_call.1} parent=5 // pred_check_branch
        %134 = sbr.rel (%p131) target = $region24
      $region23: #{tpu_custom_call.1} parent=5 // pred_region
        %s135 = ssub.s32 %s13, 1
        %s136 = sand.u32 %s40, 1
        %s137 = scalar_lea.sflag [#allocation3], %s136
        %s138 = sand.u32 %s40, 1
        %s139 = smul.addr %s138, 64
        %s140 = scalar_lea.vmem [#allocation2], %s139
        // Predicated region
        $region25: #{tpu_custom_call.1} parent=23 // pred_check
          %p141 = pneg %p53
        $region26: #{tpu_custom_call.1} parent=23 // pred_check_branch
          %143 = sbr.rel (%p141) target = $region28
        $region27: #{tpu_custom_call.1} parent=23 // pred_region
          %144 = dma.done %s137, 1024
        $region28: #{tpu_custom_call.1} parent=23 // pred_fallthru
          _
        %s145 = sand.u32 %s40, 1
        %s146 = scalar_lea.sflag [#allocation3], %s145
        %s147 = sand.u32 %s40, 1
        %s148 = smul.addr %s147, 64
        %s149 = scalar_lea.vmem [#allocation2], %s148
        %p150 = pneg %p53
        %p151 = pneg %p50
        %p152 = pneg %p81
        %p153 = pneg %p78
        %s154 = sand.u32 %s68, 1
        %s155 = scalar_lea.sflag [#allocation4], %s154
        %s156 = sand.u32 %s68, 1
        %s157 = smul.addr %s156, 8
        %s158 = scalar_lea.vmem [#allocation5], %s157
        %s159 = smul.u32 8, %s22
        %s160 = ssub.s32 10, %s159
        %p161 = scmp.lt.s32.totalorder %s160, 8
        %s162 = scalar_select %p161, %s160, 8
        %s163 = smul.u32 128, %s162
        %v164 = vld [vmem:[%s140] sm:$0xff]
        %v165 = vld [vmem:[%s140 + $0x8] sm:$0xff]
        %v166 = vld [vmem:[%s140 + $0x10] sm:$0xff]
        %v167 = vld [vmem:[%s140 + $0x18] sm:$0xff]
        %v168 = vld [vmem:[%s140 + $0x20] sm:$0xff]
        %v169 = vld [vmem:[%s140 + $0x28] sm:$0xff]
        %v170 = vld [vmem:[%s140 + $0x30] sm:$0xff]
        %v171 = vld [vmem:[%s140 + $0x38] sm:$0xff]
        %v172 = vrot.slane %v164, 4
        %v173 = vadd.f32 %v164, %v172
        %v174 = vrot.slane %v173, 2
        %v175 = vadd.f32 %v173, %v174
        %v176 = vrot.slane %v175, 1
        %v177 = vadd.f32 %v175, %v176
        %v178 = vrot.slane %v165, 4
        %v179 = vadd.f32 %v165, %v178
        %v180 = vrot.slane %v179, 2
        %v181 = vadd.f32 %v179, %v180
        %v182 = vrot.slane %v181, 1
        %v183 = vadd.f32 %v181, %v182
        %v184 = vrot.slane %v166, 4
        %v185 = vadd.f32 %v166, %v184
        %v186 = vrot.slane %v185, 2
        %v187 = vadd.f32 %v185, %v186
        %v188 = vrot.slane %v187, 1
        %v189 = vadd.f32 %v187, %v188
        %v190 = vrot.slane %v167, 4
        %v191 = vadd.f32 %v167, %v190
        %v192 = vrot.slane %v191, 2
        %v193 = vadd.f32 %v191, %v192
        %v194 = vrot.slane %v193, 1
        %v195 = vadd.f32 %v193, %v194
        %v196 = vrot.slane %v168, 4
        %v197 = vadd.f32 %v168, %v196
        %v198 = vrot.slane %v197, 2
        %v199 = vadd.f32 %v197, %v198
        %v200 = vrot.slane %v199, 1
        %v201 = vadd.f32 %v199, %v200
        %v202 = vrot.slane %v169, 4
        %v203 = vadd.f32 %v169, %v202
        %v204 = vrot.slane %v203, 2
        %v205 = vadd.f32 %v203, %v204
        %v206 = vrot.slane %v205, 1
        %v207 = vadd.f32 %v205, %v206
        %v208 = vrot.slane %v170, 4
        %v209 = vadd.f32 %v170, %v208
        %v210 = vrot.slane %v209, 2
        %v211 = vadd.f32 %v209, %v210
        %v212 = vrot.slane %v211, 1
        %v213 = vadd.f32 %v211, %v212
        %v214 = vrot.slane %v171, 4
        %v215 = vadd.f32 %v171, %v214
        %v216 = vrot.slane %v215, 2
        %v217 = vadd.f32 %v215, %v216
        %v218 = vrot.slane %v217, 1
        %v219 = vadd.f32 %v217, %v218
        %vm228 = vcmask 1041409
        %v229 = vsel %vm228, %v183, %v177
        %vm230 = vcmask 1042434
        %v231 = vsel %vm230, %v189, %v229
        %vm232 = vcmask 1043459
        %v233 = vsel %vm232, %v195, %v231
        %vm234 = vcmask 1044484
        %v235 = vsel %vm234, %v201, %v233
        %vm236 = vcmask 1045509
        %v237 = vsel %vm236, %v207, %v235
        %vm238 = vcmask 1046534
        %v239 = vsel %vm238, %v213, %v237
        %vm240 = vcmask 1047559
        %v241 = vsel %vm240, %v219, %v239
        %243 = vst [vmem:[%s158] sm:$0xff] %v241
        %s244 = sand.u32 %s68, 1
        %s245 = scalar_lea.sflag [#allocation4], %s244
        %s246 = sand.u32 %s68, 1
        %s247 = smul.addr %s246, 8
        %s248 = scalar_lea.vmem [#allocation5], %s247
        // Predicated region
        $region29: #{tpu_custom_call.1} parent=23 // pred_check
          %p249 = pneg %p78
        $region30: #{tpu_custom_call.1} parent=23 // pred_check_branch
          %251 = sbr.rel (%p249) target = $region32
        $region31: #{tpu_custom_call.1} parent=23 // pred_region
          %s253 = ssub.s32 128, 128
          %254 = vsyncadd %s245, %s253
          %s255 = smul.addr %s22, 2
          %s256 = sadd.s32 %s23, %s255
          %s257 = smul.addr %s256, 128
          %s258 = scalar_lea.hbm %s1, %s257
          %s260 = sshll.u32 %s248, 4
          %s261 = int_to_ptr.vmem [resolvable:$true] %s260
          %263 = dma.vmem_to_hbm [thread:$0]  %s261, 128, %s258, %s245
        $region32: #{tpu_custom_call.1} parent=23 // pred_fallthru
          _
      $region24: #{tpu_custom_call.1} parent=5 // pred_fallthru
        _
      %p264 = scmp.le.s32.totalorder 2, %s13
      // Predicated region
      $region33: #{tpu_custom_call.1} parent=5 // pred_check
        %p265 = pneg %p264
      $region34: #{tpu_custom_call.1} parent=5 // pred_check_branch
        %267 = sbr.rel (%p265) target = $region36
      $region35: #{tpu_custom_call.1} parent=5 // pred_region
        %s268 = ssub.s32 %s13, 2
        // Predicated region
        $region37: #{tpu_custom_call.1} parent=35 // pred_check
          %p269 = pneg %p84
        $region38: #{tpu_custom_call.1} parent=35 // pred_check_branch
          %271 = sbr.rel (%p269) target = $region40
        $region39: #{tpu_custom_call.1} parent=35 // pred_region
          %s272 = sand.u32 %s69, 1
          %s273 = scalar_lea.sflag [#allocation4], %s272
          %s274 = sand.u32 %s69, 1
          %s275 = smul.addr %s274, 8
          %s276 = scalar_lea.vmem [#allocation5], %s275
          %277 = dma.done %s273, 128
        $region40: #{tpu_custom_call.1} parent=35 // pred_fallthru
          _
      $region36: #{tpu_custom_call.1} parent=5 // pred_fallthru
        _
    $region6: #{tpu_custom_call.1} parent=1 // loop_footer
      %s17 = sadd.s32 1, %s13
    $region7: #{tpu_custom_call.1} parent=1 // loop_footer_branch
      %12 = sbr.rel target = $region3
    $region8: #{tpu_custom_call.1} parent=1 // loop_exit
      _
    %278 = vsyncpa [#allocation3], 1
    %s279 = scalar_lea.sflag [#allocation3], 1
    %280 = vsyncpa %s279, 1
    %281 = vsyncpa [#allocation4], 1
    %s282 = scalar_lea.sflag [#allocation4], 1
    %283 = vsyncpa %s282, 1

</llo_original>
